<compile_context>
chip_gen: v7x
topology: tpu7x:2x2x1
jax: 0.10.0
libtpu: 0.0.40
codegen_flags: <defaults>
</compile_context>

<pallas_src>
import jax
import jax.numpy as jnp
from jax.experimental import pallas as pl
from jax.experimental.pallas import tpu as pltpu


def _round_up(x, m):
    return ((x + m - 1) // m) * m


def _pad2d(a, rows, cols, dtype):
    """Zero-pad a 2D array to (rows, cols) and cast; no-op copy avoided when
    already the right shape/dtype."""
    a = a.astype(dtype)
    r, c = a.shape
    if r == rows and c == cols:
        return a
    return jnp.pad(a, ((0, rows - r), (0, cols - c)))


def generator_kernel(x_ref, w1_ref, b1_ref, w2_ref, b2_ref, w3_ref, b3_ref,
                     o_ref):
    # fc1 + ReLU  (bf16 operands, f32 accumulation on the MXU)
    h1 = jnp.dot(x_ref[...], w1_ref[...], preferred_element_type=jnp.float32)
    h1 = jnp.maximum(h1 + b1_ref[...], 0.0)
    # fc2 + ReLU
    h2 = jnp.dot(h1.astype(jnp.bfloat16), w2_ref[...],
                 preferred_element_type=jnp.float32)
    h2 = jnp.maximum(h2 + b2_ref[...], 0.0)
    # fc3 + Sigmoid (exp / reciprocal run on the EUP slot)
    logits = jnp.dot(h2.astype(jnp.bfloat16), w3_ref[...],
                     preferred_element_type=jnp.float32)
    logits = logits + b3_ref[...]
    o_ref[...] = jax.nn.sigmoid(logits).astype(o_ref.dtype)


def generator_forward(x, params, *, batch_tile=256):
    """x: (B, input_dim) float32. Returns (B, output_dim) float32.

    params = (w1, b1, w2, b2, w3, b3) with weights stored (in_features,
    out_features), i.e. y = x @ W + b (same math as PyTorch's x @ W.T + b).
    """
    w1, b1, w2, b2, w3, b3 = params
    B, d_in = x.shape
    d_h1 = w1.shape[1]
    d_h2 = w2.shape[1]
    d_out = w3.shape[1]

    # Lane-dense padding of feature dims to multiples of 128.
    d_in_p = _round_up(d_in, 128)
    d_h1_p = _round_up(d_h1, 128)
    d_h2_p = _round_up(d_h2, 128)
    d_out_p = _round_up(d_out, 128)

    # Batch tile: at most `batch_tile`, multiple of 16 (bf16 sublane packing),
    # shrunk for small batches so a tiny batch isn't padded to 256 rows.
    bt = min(batch_tile, _round_up(B, 16))
    B_p = _round_up(B, bt)
    grid = (B_p // bt,)

    # Zero-padded, bf16-cast operands (zero rows/cols contribute nothing).
    x_p = _pad2d(x, B_p, d_in_p, jnp.bfloat16)
    w1_p = _pad2d(w1, d_in_p, d_h1_p, jnp.bfloat16)
    w2_p = _pad2d(w2, d_h1_p, d_h2_p, jnp.bfloat16)
    w3_p = _pad2d(w3, d_h2_p, d_out_p, jnp.bfloat16)
    b1_p = _pad2d(b1.reshape(1, -1), 1, d_h1_p, jnp.float32)
    b2_p = _pad2d(b2.reshape(1, -1), 1, d_h2_p, jnp.float32)
    b3_p = _pad2d(b3.reshape(1, -1), 1, d_out_p, jnp.float32)

    out_p = pl.pallas_call(
        generator_kernel,
        out_shape=jax.ShapeDtypeStruct((B_p, d_out_p), jnp.float32),
        grid_spec=pltpu.PrefetchScalarGridSpec(
            num_scalar_prefetch=0,
            grid=grid,
            in_specs=[
                pl.BlockSpec((bt, d_in_p), lambda i: (i, 0)),        # x tile
                pl.BlockSpec((d_in_p, d_h1_p), lambda i: (0, 0)),    # W1
                pl.BlockSpec((1, d_h1_p), lambda i: (0, 0)),         # b1
                pl.BlockSpec((d_h1_p, d_h2_p), lambda i: (0, 0)),    # W2
                pl.BlockSpec((1, d_h2_p), lambda i: (0, 0)),         # b2
                pl.BlockSpec((d_h2_p, d_out_p), lambda i: (0, 0)),   # W3
                pl.BlockSpec((1, d_out_p), lambda i: (0, 0)),        # b3
            ],
            out_specs=pl.BlockSpec((bt, d_out_p), lambda i: (i, 0)),
        ),
        compiler_params=pltpu.CompilerParams(
            dimension_semantics=("parallel",),
            vmem_limit_bytes=32 * 1024 * 1024,
        ),
    )(x_p, w1_p, b1_p, w2_p, b2_p, w3_p, b3_p)

    return out_p[:B, :d_out]


def init_params(key, input_dim, output_dim):
    """Deterministic synthetic parameter init (shapes match nn.Linear)."""
    k1, k2, k3, k4, k5, k6 = jax.random.split(key, 6)
    # Weights stored as (in_features, out_features).
    w1 = jax.random.normal(k1, (input_dim, 256), jnp.float32) * 0.05
    b1 = jax.random.normal(k2, (1, 256), jnp.float32) * 0.05
    w2 = jax.random.normal(k3, (256, 512), jnp.float32) * 0.05
    b2 = jax.random.normal(k4, (1, 512), jnp.float32) * 0.05
    w3 = jax.random.normal(k5, (512, output_dim), jnp.float32) * 0.05
    b3 = jax.random.normal(k6, (1, output_dim), jnp.float32) * 0.05
    return (w1, b1, w2, b2, w3, b3)


def reference_forward(x, params):
    w1, b1, w2, b2, w3, b3 = params
    h1 = jnp.maximum(x @ w1 + b1, 0.0)
    h2 = jnp.maximum(h1 @ w2 + b2, 0.0)
    return jax.nn.sigmoid(h2 @ w3 + b3)


if __name__ == "__main__":
    key = jax.random.PRNGKey(0)
    kx, kp = jax.random.split(key)

    batch = 16
    input_dim = 64      # padded to 128 inside the wrapper
    output_dim = 100    # padded to 128 inside the wrapper, sliced back

    x = jax.random.normal(kx, (batch, input_dim), jnp.float32)
    params = init_params(kp, input_dim, output_dim)

    out = generator_forward(x, params)
    out = jax.block_until_ready(out)

    ref = reference_forward(x, params)   # f32 reference
    assert out.shape == (batch, output_dim)
    # bf16 MXU inputs with f32 accumulation -> relaxed tolerance vs f32 ref.
    assert jnp.allclose(out, ref, atol=2e-2, rtol=2e-2), "mismatch vs reference"

    print("KERNEL_OK")
</pallas_src>

<mosaic_0001>
module attributes {stable_mosaic.version = 11 : i64} {
  func.func @generator_kernel(%arg0: i32, %arg1: memref<16x128xbf16, #tpu.memory_space<vmem>>, %arg2: memref<128x256xbf16, #tpu.memory_space<vmem>>, %arg3: memref<1x256xf32, #tpu.memory_space<vmem>>, %arg4: memref<256x512xbf16, #tpu.memory_space<vmem>>, %arg5: memref<1x512xf32, #tpu.memory_space<vmem>>, %arg6: memref<512x128xbf16, #tpu.memory_space<vmem>>, %arg7: memref<1x128xf32, #tpu.memory_space<vmem>>, %arg8: memref<16x128xf32, #tpu.memory_space<vmem>>) attributes {dimension_semantics = [#tpu.dimension_semantics<parallel>], iteration_bounds = array<i64: 1>, scalar_prefetch = 0 : i64, scratch_operands = 0 : i64, tpu.core_type = #tpu.core_type<tc>, window_params = [{transform_indices = @transform_0, window_bounds = array<i64: 16, 128>}, {pipeline_mode = #tpu.pipeline_mode<synchronous>, transform_indices = @transform_1, window_bounds = array<i64: 128, 256>}, {pipeline_mode = #tpu.pipeline_mode<synchronous>, transform_indices = @transform_2, window_bounds = array<i64: 1, 256>}, {pipeline_mode = #tpu.pipeline_mode<synchronous>, transform_indices = @transform_3, window_bounds = array<i64: 256, 512>}, {pipeline_mode = #tpu.pipeline_mode<synchronous>, transform_indices = @transform_4, window_bounds = array<i64: 1, 512>}, {pipeline_mode = #tpu.pipeline_mode<synchronous>, transform_indices = @transform_5, window_bounds = array<i64: 512, 128>}, {pipeline_mode = #tpu.pipeline_mode<synchronous>, transform_indices = @transform_6, window_bounds = array<i64: 1, 128>}, {transform_indices = @transform_7, window_bounds = array<i64: 16, 128>}]} {
    %c0 = arith.constant 0 : index
    %c0_0 = arith.constant 0 : index
    %0 = vector.load %arg1[%c0, %c0_0] : memref<16x128xbf16, #tpu.memory_space<vmem>>, vector<16x128xbf16>
    %c0_1 = arith.constant 0 : index
    %c0_2 = arith.constant 0 : index
    %1 = vector.load %arg2[%c0_1, %c0_2] : memref<128x256xbf16, #tpu.memory_space<vmem>>, vector<128x256xbf16>
    %cst = arith.constant dense<0.000000e+00> : vector<16x256xf32>
    %2 = tpu.matmul %0, %1, %cst {dimension_numbers = #tpu.dot_dimension_numbers<[1], [0], [0], [1], [0, 0, 1, 1], [], []>} : vector<16x128xbf16>, vector<128x256xbf16>, vector<16x256xf32> -> vector<16x256xf32>
    %c0_3 = arith.constant 0 : index
    %c0_4 = arith.constant 0 : index
    %3 = vector.load %arg3[%c0_3, %c0_4] : memref<1x256xf32, #tpu.memory_space<vmem>>, vector<1x256xf32>
    %4 = vector.broadcast %3 : vector<1x256xf32> to vector<16x256xf32>
    %5 = arith.addf %2, %4 : vector<16x256xf32>
    %cst_5 = arith.constant 0.000000e+00 : f32
    %6 = vector.broadcast %cst_5 : f32 to vector<16x256xf32>
    %7 = arith.maximumf %5, %6 : vector<16x256xf32>
    %8 = arith.truncf %7 : vector<16x256xf32> to vector<16x256xbf16>
    %c0_6 = arith.constant 0 : index
    %c0_7 = arith.constant 0 : index
    %9 = vector.load %arg4[%c0_6, %c0_7] : memref<256x512xbf16, #tpu.memory_space<vmem>>, vector<256x512xbf16>
    %cst_8 = arith.constant dense<0.000000e+00> : vector<16x512xf32>
    %10 = tpu.matmul %8, %9, %cst_8 {dimension_numbers = #tpu.dot_dimension_numbers<[1], [0], [0], [1], [0, 0, 1, 1], [], []>} : vector<16x256xbf16>, vector<256x512xbf16>, vector<16x512xf32> -> vector<16x512xf32>
    %c0_9 = arith.constant 0 : index
    %c0_10 = arith.constant 0 : index
    %11 = vector.load %arg5[%c0_9, %c0_10] : memref<1x512xf32, #tpu.memory_space<vmem>>, vector<1x512xf32>
    %12 = vector.broadcast %11 : vector<1x512xf32> to vector<16x512xf32>
    %13 = arith.addf %10, %12 : vector<16x512xf32>
    %cst_11 = arith.constant 0.000000e+00 : f32
    %14 = vector.broadcast %cst_11 : f32 to vector<16x512xf32>
    %15 = arith.maximumf %13, %14 : vector<16x512xf32>
    %16 = arith.truncf %15 : vector<16x512xf32> to vector<16x512xbf16>
    %c0_12 = arith.constant 0 : index
    %c0_13 = arith.constant 0 : index
    %17 = vector.load %arg6[%c0_12, %c0_13] : memref<512x128xbf16, #tpu.memory_space<vmem>>, vector<512x128xbf16>
    %cst_14 = arith.constant dense<0.000000e+00> : vector<16x128xf32>
    %18 = tpu.matmul %16, %17, %cst_14 {dimension_numbers = #tpu.dot_dimension_numbers<[1], [0], [0], [1], [0, 0, 1, 1], [], []>} : vector<16x512xbf16>, vector<512x128xbf16>, vector<16x128xf32> -> vector<16x128xf32>
    %c0_15 = arith.constant 0 : index
    %c0_16 = arith.constant 0 : index
    %19 = vector.load %arg7[%c0_15, %c0_16] : memref<1x128xf32, #tpu.memory_space<vmem>>, vector<1x128xf32>
    %20 = vector.broadcast %19 : vector<1x128xf32> to vector<16x128xf32>
    %21 = arith.addf %18, %20 : vector<16x128xf32>
    %22 = arith.negf %21 : vector<16x128xf32>
    %23 = math.exp %22 : vector<16x128xf32>
    %cst_17 = arith.constant 1.000000e+00 : f32
    %24 = vector.broadcast %cst_17 : f32 to vector<16x128xf32>
    %25 = arith.addf %24, %23 : vector<16x128xf32>
    %26 = arith.divf %24, %25 : vector<16x128xf32>
    %c0_18 = arith.constant 0 : index
    %c0_19 = arith.constant 0 : index
    %27 = vector.load %arg8[%c0_18, %c0_19] : memref<16x128xf32, #tpu.memory_space<vmem>>, vector<16x128xf32>
    tpu.vector_store %arg8[%c0_18, %c0_19], %26 {strides = array<i32>} : memref<16x128xf32, #tpu.memory_space<vmem>>, vector<16x128xf32>,
    return
  }
  func.func @transform_0(%arg0: i32) -> (i32, i32) {
    %c0_i32 = arith.constant 0 : i32
    %c0_i32_0 = arith.constant 0 : i32
    return %arg0, %c0_i32 : i32, i32
  }
  func.func @transform_1(%arg0: i32) -> (i32, i32) {
    %c0_i32 = arith.constant 0 : i32
    %c0_i32_0 = arith.constant 0 : i32
    %c0_i32_1 = arith.constant 0 : i32
    return %c0_i32, %c0_i32_0 : i32, i32
  }
  func.func @transform_2(%arg0: i32) -> (i32, i32) {
    %c0_i32 = arith.constant 0 : i32
    %c0_i32_0 = arith.constant 0 : i32
    %c0_i32_1 = arith.constant 0 : i32
    return %c0_i32, %c0_i32_0 : i32, i32
  }
  func.func @transform_3(%arg0: i32) -> (i32, i32) {
    %c0_i32 = arith.constant 0 : i32
    %c0_i32_0 = arith.constant 0 : i32
    %c0_i32_1 = arith.constant 0 : i32
    return %c0_i32, %c0_i32_0 : i32, i32
  }
  func.func @transform_4(%arg0: i32) -> (i32, i32) {
    %c0_i32 = arith.constant 0 : i32
    %c0_i32_0 = arith.constant 0 : i32
    %c0_i32_1 = arith.constant 0 : i32
    return %c0_i32, %c0_i32_0 : i32, i32
  }
  func.func @transform_5(%arg0: i32) -> (i32, i32) {
    %c0_i32 = arith.constant 0 : i32
    %c0_i32_0 = arith.constant 0 : i32
    %c0_i32_1 = arith.constant 0 : i32
    return %c0_i32, %c0_i32_0 : i32, i32
  }
  func.func @transform_6(%arg0: i32) -> (i32, i32) {
    %c0_i32 = arith.constant 0 : i32
    %c0_i32_0 = arith.constant 0 : i32
    %c0_i32_1 = arith.constant 0 : i32
    return %c0_i32, %c0_i32_0 : i32, i32
  }
  func.func @transform_7(%arg0: i32) -> (i32, i32) {
    %c0_i32 = arith.constant 0 : i32
    %c0_i32_0 = arith.constant 0 : i32
    return %arg0, %c0_i32 : i32, i32
  }
}

</mosaic_0001>

<llo_original>
// kernel: tpu_custom_call.1
$region0: #{tpu_custom_call.1}
  #allocation0 [shape = 'u32[]', space=smem, size = 0x4, offset = 0x4, fixed_abs, tag = 'smem constant byte address 0x4 - core index']
  #allocation1 [shape = 'u32[144,128]{1,0:T(1,128)}', space=vmem, size = 0x12000, scoped, tag = 'internal scratch']
  %s0 = inlined_call_operand.hbm [shape: bf16[16,128], index: 0, kind: input, shape index: {}]
  %s1 = inlined_call_operand.hbm [shape: bf16[128,256], index: 1, kind: input, shape index: {}]
  %s2 = inlined_call_operand.vmem [shape: f32[1,256], index: 2, kind: input, shape index: {}]
  %s3 = inlined_call_operand.hbm [shape: bf16[256,512], index: 3, kind: input, shape index: {}]
  %s4 = inlined_call_operand.vmem [shape: f32[1,512], index: 4, kind: input, shape index: {}]
  %s5 = inlined_call_operand.hbm [shape: bf16[512,128], index: 5, kind: input, shape index: {}]
  %s6 = inlined_call_operand.vmem [shape: f32[1,128], index: 6, kind: input, shape index: {}]
  %s7 = inlined_call_operand.hbm [shape: f32[16,128], index: 7, kind: output, shape index: {}]
  %s8 = sld [smem:[#allocation0]]
  $region54: #{tpu_custom_call.1} parent=0
    _
  %s10 = ssub.s32 1, %s8
  %s11 = scalar_select 0, %s10, %s8
  $region1: #{tpu_custom_call.1} parent=0
    #allocation2 [shape = 'u8[4096]{0}', space=vmem, size = 0x1000, scoped, tag = 'input window, operand 0, single buffered']
    #allocation3 [shape = 's32[1]{0}', space=sflag, size = 0x4, scoped, tag = 'scoped memory for tpu_custom_call.1']
    #allocation4 [shape = 's32[1]{0}', space=sflag, size = 0x4, scoped, tag = 'scoped memory for tpu_custom_call.1']
    #allocation5 [shape = 'u8[65536]{0}', space=vmem, size = 0x10000, scoped, tag = 'input window, operand 1, single buffered']
    #allocation6 [shape = 's32[1]{0}', space=sflag, size = 0x4, scoped, tag = 'scoped memory for tpu_custom_call.1']
    #allocation7 [shape = 'u8[262144]{0}', space=vmem, size = 0x40000, scoped, tag = 'input window, operand 3, single buffered']
    #allocation8 [shape = 'u8[131072]{0}', space=vmem, size = 0x20000, scoped, tag = 'input window, operand 5, single buffered']
    #allocation9 [shape = 's32[1]{0}', space=sflag, size = 0x4, scoped, tag = 'scoped memory for tpu_custom_call.1']
    #allocation10 [shape = 'u8[8192]{0}', space=vmem, size = 0x2000, scoped, tag = 'output window, operand 0, single buffered']
    %12 = vsyncpa [#allocation3], 0
    %13 = vsyncpa [#allocation6], 0
    %14 = vsyncpa [#allocation9], 0
    %15 = vsyncpa [#allocation4], 0
    // Predicated region
    $region2: #{tpu_custom_call.1} parent=1 // pred_check
      _
    $region3: #{tpu_custom_call.1} parent=1 // pred_check_branch
      %17 = sbr.rel (0) target = $region5
    $region4: #{tpu_custom_call.1} parent=1 // pred_region
      %s19 = ssub.s32 128, 128
      %20 = vsyncadd [#allocation3], %s19
      %s21 = sshll.u32 [#allocation2], 4
      %s22 = int_to_ptr.vmem [resolvable:$true] %s21
      %27 = dma.hbm_to_vmem [thread:$0]  %s0, 128, %s22, [#allocation3], 64, 64, 4
    $region5: #{tpu_custom_call.1} parent=1 // pred_fallthru
      _
    // Predicated region
    $region6: #{tpu_custom_call.1} parent=1 // pred_check
      _
    $region7: #{tpu_custom_call.1} parent=1 // pred_check_branch
      %29 = sbr.rel (0) target = $region9
    $region8: #{tpu_custom_call.1} parent=1 // pred_region
      %s31 = ssub.s32 2048, 2048
      %32 = vsyncadd [#allocation6], %s31
      %s33 = sshll.u32 [#allocation5], 4
      %s34 = int_to_ptr.vmem [resolvable:$true] %s33
      %39 = dma.hbm_to_vmem [thread:$0]  %s1, 2048, %s34, [#allocation6], 128, 128, 8
    $region9: #{tpu_custom_call.1} parent=1 // pred_fallthru
      _
    // Predicated region
    $region10: #{tpu_custom_call.1} parent=1 // pred_check
      _
    $region11: #{tpu_custom_call.1} parent=1 // pred_check_branch
      %41 = sbr.rel (0) target = $region13
    $region12: #{tpu_custom_call.1} parent=1 // pred_region
      _
    $region13: #{tpu_custom_call.1} parent=1 // pred_fallthru
      _
    // Predicated region
    $region14: #{tpu_custom_call.1} parent=1 // pred_check
      _
    $region15: #{tpu_custom_call.1} parent=1 // pred_check_branch
      %43 = sbr.rel (0) target = $region17
    $region16: #{tpu_custom_call.1} parent=1 // pred_region
      %s45 = ssub.s32 8192, 8192
      %46 = vsyncadd [#allocation6], %s45
      %s47 = sshll.u32 [#allocation7], 4
      %s48 = int_to_ptr.vmem [resolvable:$true] %s47
      %53 = dma.hbm_to_vmem [thread:$0]  %s3, 8192, %s48, [#allocation6], 256, 256, 16
    $region17: #{tpu_custom_call.1} parent=1 // pred_fallthru
      _
    // Predicated region
    $region18: #{tpu_custom_call.1} parent=1 // pred_check
      _
    $region19: #{tpu_custom_call.1} parent=1 // pred_check_branch
      %55 = sbr.rel (0) target = $region21
    $region20: #{tpu_custom_call.1} parent=1 // pred_region
      _
    $region21: #{tpu_custom_call.1} parent=1 // pred_fallthru
      _
    // Predicated region
    $region22: #{tpu_custom_call.1} parent=1 // pred_check
      _
    $region23: #{tpu_custom_call.1} parent=1 // pred_check_branch
      %57 = sbr.rel (0) target = $region25
    $region24: #{tpu_custom_call.1} parent=1 // pred_region
      %s59 = ssub.s32 4096, 4096
      %60 = vsyncadd [#allocation9], %s59
      %s61 = sshll.u32 [#allocation8], 4
      %s62 = int_to_ptr.vmem [resolvable:$true] %s61
      %67 = dma.hbm_to_vmem [thread:$0]  %s5, 4096, %s62, [#allocation9], 64, 64, 4
    $region25: #{tpu_custom_call.1} parent=1 // pred_fallthru
      _
    // Predicated region
    $region26: #{tpu_custom_call.1} parent=1 // pred_check
      _
    $region27: #{tpu_custom_call.1} parent=1 // pred_check_branch
      %69 = sbr.rel (0) target = $region29
    $region28: #{tpu_custom_call.1} parent=1 // pred_region
      _
    $region29: #{tpu_custom_call.1} parent=1 // pred_fallthru
      _
    // Predicated region
    $region30: #{tpu_custom_call.1} parent=1 // pred_check
      _
    $region31: #{tpu_custom_call.1} parent=1 // pred_check_branch
      %71 = sbr.rel (0) target = $region33
    $region32: #{tpu_custom_call.1} parent=1 // pred_region
      %72 = dma.done [#allocation3], 128
    $region33: #{tpu_custom_call.1} parent=1 // pred_fallthru
      _
    // Predicated region
    $region34: #{tpu_custom_call.1} parent=1 // pred_check
      _
    $region35: #{tpu_custom_call.1} parent=1 // pred_check_branch
      %74 = sbr.rel (0) target = $region37
    $region36: #{tpu_custom_call.1} parent=1 // pred_region
      %75 = dma.done [#allocation6], 2048
    $region37: #{tpu_custom_call.1} parent=1 // pred_fallthru
      _
    // Predicated region
    $region38: #{tpu_custom_call.1} parent=1 // pred_check
      _
    $region39: #{tpu_custom_call.1} parent=1 // pred_check_branch
      %77 = sbr.rel (0) target = $region41
    $region40: #{tpu_custom_call.1} parent=1 // pred_region
      %78 = dma.done [#allocation6], 8192
    $region41: #{tpu_custom_call.1} parent=1 // pred_fallthru
      _
    // Predicated region
    $region42: #{tpu_custom_call.1} parent=1 // pred_check
      _
    $region43: #{tpu_custom_call.1} parent=1 // pred_check_branch
      %80 = sbr.rel (0) target = $region45
    $region44: #{tpu_custom_call.1} parent=1 // pred_region
      %81 = dma.done [#allocation9], 4096
    $region45: #{tpu_custom_call.1} parent=1 // pred_fallthru
      _
    %v83 = vld [vmem:[#allocation2] sm:$0xf]
    %v84 = vld [vmem:[#allocation2 + $0x4] sm:$0xf]
    %v85 = vld [vmem:[#allocation5] sm:$0xff]
    %v86 = vld [vmem:[#allocation5 + $0x8] sm:$0xff]
    %v87 = vld [vmem:[#allocation5 + $0x10] sm:$0xff]
    %v88 = vld [vmem:[#allocation5 + $0x18] sm:$0xff]
    %v89 = vld [vmem:[#allocation5 + $0x20] sm:$0xff]
    %v90 = vld [vmem:[#allocation5 + $0x28] sm:$0xff]
    %v91 = vld [vmem:[#allocation5 + $0x30] sm:$0xff]
    %v92 = vld [vmem:[#allocation5 + $0x38] sm:$0xff]
    %v93 = vld [vmem:[#allocation5 + $0x40] sm:$0xff]
    %v94 = vld [vmem:[#allocation5 + $0x48] sm:$0xff]
    %v95 = vld [vmem:[#allocation5 + $0x50] sm:$0xff]
    %v96 = vld [vmem:[#allocation5 + $0x58] sm:$0xff]
    %v97 = vld [vmem:[#allocation5 + $0x60] sm:$0xff]
    %v98 = vld [vmem:[#allocation5 + $0x68] sm:$0xff]
    %v99 = vld [vmem:[#allocation5 + $0x70] sm:$0xff]
    %v100 = vld [vmem:[#allocation5 + $0x78] sm:$0xff]
    %v101 = vld [vmem:[%s2] sm:$0x3]
    %v103 = vlaneseq
    %v104 = vshrl.u32 %v103, 7
    %v105 = vsub.s32 0, %v104
    %v106 = vrot.slane %v101, %v105
    %v107 = vlaneseq
    %v108 = vshrl.u32 %v107, 7
    %v109 = vsub.s32 1, %v108
    %v110 = vrot.slane %v101, %v109
    %v115 = vunpack.c.l.b16 %v83
    %v116 = vunpack.c.l.b16 %v84
    %v117 = vpack.c.b16 %v116, %v115
    %v135 = vunpack.c.l.b16 %v85
    %v136 = vunpack.c.h.b16 %v85
    %v137 = vunpack.c.l.b16 %v86
    %v138 = vunpack.c.h.b16 %v86
    %v139 = vunpack.c.l.b16 %v87
    %v140 = vunpack.c.h.b16 %v87
    %v141 = vunpack.c.l.b16 %v88
    %v142 = vunpack.c.h.b16 %v88
    %v143 = vunpack.c.l.b16 %v89
    %v144 = vunpack.c.h.b16 %v89
    %v145 = vunpack.c.l.b16 %v90
    %v146 = vunpack.c.h.b16 %v90
    %v147 = vunpack.c.l.b16 %v91
    %v148 = vunpack.c.h.b16 %v91
    %v149 = vunpack.c.l.b16 %v92
    %v150 = vunpack.c.h.b16 %v92
    %v151 = vunpack.c.l.b16 %v93
    %v152 = vunpack.c.h.b16 %v93
    %v153 = vunpack.c.l.b16 %v94
    %v154 = vunpack.c.h.b16 %v94
    %v155 = vunpack.c.l.b16 %v95
    %v156 = vunpack.c.h.b16 %v95
    %v157 = vunpack.c.l.b16 %v96
    %v158 = vunpack.c.h.b16 %v96
    %v159 = vunpack.c.l.b16 %v97
    %v160 = vunpack.c.h.b16 %v97
    %v161 = vunpack.c.l.b16 %v98
    %v162 = vunpack.c.h.b16 %v98
    %v163 = vunpack.c.l.b16 %v99
    %v164 = vunpack.c.h.b16 %v99
    %v165 = vunpack.c.l.b16 %v100
    %v166 = vunpack.c.h.b16 %v100
    %v167 = vpack.c.b16 %v137, %v135
    %v168 = vpack.c.b16 %v138, %v136
    %v169 = vpack.c.b16 %v141, %v139
    %v170 = vpack.c.b16 %v142, %v140
    %v171 = vpack.c.b16 %v145, %v143
    %v172 = vpack.c.b16 %v146, %v144
    %v173 = vpack.c.b16 %v149, %v147
    %v174 = vpack.c.b16 %v150, %v148
    %v175 = vpack.c.b16 %v153, %v151
    %v176 = vpack.c.b16 %v154, %v152
    %v177 = vpack.c.b16 %v157, %v155
    %v178 = vpack.c.b16 %v158, %v156
    %v179 = vpack.c.b16 %v161, %v159
    %v180 = vpack.c.b16 %v162, %v160
    %v181 = vpack.c.b16 %v165, %v163
    %v182 = vpack.c.b16 %v166, %v164
    %199 = vmatprep.subr.bf16.mxu0 %v168
    %200 = vmatpush1.bf16.msra.mxu0 %v167
    %201 = vmatprep.subr.bf16.mxu0 %v170
    %202 = vmatpush1.bf16.msra.mxu0 %v169
    %203 = vmatprep.subr.bf16.mxu0 %v172
    %204 = vmatpush1.bf16.msra.mxu0 %v171
    %205 = vmatprep.subr.bf16.mxu0 %v174
    %206 = vmatpush1.bf16.msra.mxu0 %v173
    %207 = vmatprep.subr.bf16.mxu0 %v176
    %208 = vmatpush1.bf16.msra.mxu0 %v175
    %209 = vmatprep.subr.bf16.mxu0 %v178
    %210 = vmatpush1.bf16.msra.mxu0 %v177
    %211 = vmatprep.subr.bf16.mxu0 %v180
    %212 = vmatpush1.bf16.msra.mxu0 %v179
    %213 = vmatprep.subr.bf16.mxu0 %v182
    %214 = vmatpush1.bf16.msra.mxu0 %v181
    %215 = vmatprep.subr.bf16.mxu0 0
    %216 = vmatpush1.bf16.msra.mxu0 0
    %217 = vmatprep.subr.bf16.mxu0 0
    %218 = vmatpush1.bf16.msra.mxu0 0
    %219 = vmatprep.subr.bf16.mxu0 0
    %220 = vmatpush1.bf16.msra.mxu0 0
    %221 = vmatprep.subr.bf16.mxu0 0
    %222 = vmatpush1.bf16.msra.mxu0 0
    %223 = vmatprep.subr.bf16.mxu0 0
    %224 = vmatpush1.bf16.msra.mxu0 0
    %225 = vmatprep.subr.bf16.mxu0 0
    %226 = vmatpush1.bf16.msra.mxu0 0
    %227 = vmatprep.subr.bf16.mxu0 0
    %228 = vmatpush1.bf16.msra.mxu0 0
    %229 = vmatprep.subr.bf16.mxu0 0
    %230 = vmatpush1.bf16.msra.mxu0 0
    %231 = vmatprep.mubr.bf16.mxu0 0
    %232 = vmatmul.mubr.bf16.gmra.mrb[0].mxu0 %v117
    %v233 = vpop.f32.mrb[0].mxu0
    %v234 = vadd.f32 %v106, %v233
    %v235 = vpop.f32.mrb[0].mxu0
    %v236 = vadd.f32 %v110, %v235
    %v237 = vpop.f32.mrb[0].mxu0
    %v238 = vadd.f32 %v106, %v237
    %v239 = vpop.f32.mrb[0].mxu0
    %v240 = vadd.f32 %v110, %v239
    %241 = vdwg.mxu0
    %v242 = vmax.f32 %v234, 0.0
    %v243 = vmax.f32 %v236, 0.0
    %v244 = vmax.f32 %v238, 0.0
    %v245 = vmax.f32 %v240, 0.0
    %v246 = vpack.c.bf16 %v244, %v242
    %v247 = vpack.c.bf16 %v245, %v243
    %v248 = vld [vmem:[#allocation7] sm:$0xff]
    %v249 = vld [vmem:[#allocation7 + $0x8] sm:$0xff]
    %v250 = vld [vmem:[#allocation7 + $0x10] sm:$0xff]
    %v251 = vld [vmem:[#allocation7 + $0x18] sm:$0xff]
    %v252 = vld [vmem:[#allocation7 + $0x20] sm:$0xff]
    %v253 = vld [vmem:[#allocation7 + $0x28] sm:$0xff]
    %v254 = vld [vmem:[#allocation7 + $0x30] sm:$0xff]
    %v255 = vld [vmem:[#allocation7 + $0x38] sm:$0xff]
    %v256 = vld [vmem:[#allocation7 + $0x40] sm:$0xff]
    %v257 = vld [vmem:[#allocation7 + $0x48] sm:$0xff]
    %v258 = vld [vmem:[#allocation7 + $0x50] sm:$0xff]
    %v259 = vld [vmem:[#allocation7 + $0x58] sm:$0xff]
    %v260 = vld [vmem:[#allocation7 + $0x60] sm:$0xff]
    %v261 = vld [vmem:[#allocation7 + $0x68] sm:$0xff]
    %v262 = vld [vmem:[#allocation7 + $0x70] sm:$0xff]
    %v263 = vld [vmem:[#allocation7 + $0x78] sm:$0xff]
    %v264 = vld [vmem:[#allocation7 + $0x80] sm:$0xff]
    %v265 = vld [vmem:[#allocation7 + $0x88] sm:$0xff]
    %v266 = vld [vmem:[#allocation7 + $0x90] sm:$0xff]
    %v267 = vld [vmem:[#allocation7 + $0x98] sm:$0xff]
    %v268 = vld [vmem:[#allocation7 + $0xa0] sm:$0xff]
    %v269 = vld [vmem:[#allocation7 + $0xa8] sm:$0xff]
    %v270 = vld [vmem:[#allocation7 + $0xb0] sm:$0xff]
    %v271 = vld [vmem:[#allocation7 + $0xb8] sm:$0xff]
    %v272 = vld [vmem:[#allocation7 + $0xc0] sm:$0xff]
    %v273 = vld [vmem:[#allocation7 + $0xc8] sm:$0xff]
    %v274 = vld [vmem:[#allocation7 + $0xd0] sm:$0xff]
    %v275 = vld [vmem:[#allocation7 + $0xd8] sm:$0xff]
    %v276 = vld [vmem:[#allocation7 + $0xe0] sm:$0xff]
    %v277 = vld [vmem:[#allocation7 + $0xe8] sm:$0xff]
    %v278 = vld [vmem:[#allocation7 + $0xf0] sm:$0xff]
    %v279 = vld [vmem:[#allocation7 + $0xf8] sm:$0xff]
    %v280 = vld [vmem:[#allocation7 + $0x100] sm:$0xff]
    %v281 = vld [vmem:[#allocation7 + $0x108] sm:$0xff]
    %v282 = vld [vmem:[#allocation7 + $0x110] sm:$0xff]
    %v283 = vld [vmem:[#allocation7 + $0x118] sm:$0xff]
    %v284 = vld [vmem:[#allocation7 + $0x120] sm:$0xff]
    %v285 = vld [vmem:[#allocation7 + $0x128] sm:$0xff]
    %v286 = vld [vmem:[#allocation7 + $0x130] sm:$0xff]
    %v287 = vld [vmem:[#allocation7 + $0x138] sm:$0xff]
    %v288 = vld [vmem:[#allocation7 + $0x140] sm:$0xff]
    %v289 = vld [vmem:[#allocation7 + $0x148] sm:$0xff]
    %v290 = vld [vmem:[#allocation7 + $0x150] sm:$0xff]
    %v291 = vld [vmem:[#allocation7 + $0x158] sm:$0xff]
    %v292 = vld [vmem:[#allocation7 + $0x160] sm:$0xff]
    %v293 = vld [vmem:[#allocation7 + $0x168] sm:$0xff]
    %v294 = vld [vmem:[#allocation7 + $0x170] sm:$0xff]
    %v295 = vld [vmem:[#allocation7 + $0x178] sm:$0xff]
    %v296 = vld [vmem:[#allocation7 + $0x180] sm:$0xff]
    %v297 = vld [vmem:[#allocation7 + $0x188] sm:$0xff]
    %v298 = vld [vmem:[#allocation7 + $0x190] sm:$0xff]
    %v299 = vld [vmem:[#allocation7 + $0x198] sm:$0xff]
    %v300 = vld [vmem:[#allocation7 + $0x1a0] sm:$0xff]
    %v301 = vld [vmem:[#allocation7 + $0x1a8] sm:$0xff]
    %v302 = vld [vmem:[#allocation7 + $0x1b0] sm:$0xff]
    %v303 = vld [vmem:[#allocation7 + $0x1b8] sm:$0xff]
    %v304 = vld [vmem:[#allocation7 + $0x1c0] sm:$0xff]
    %v305 = vld [vmem:[#allocation7 + $0x1c8] sm:$0xff]
    %v306 = vld [vmem:[#allocation7 + $0x1d0] sm:$0xff]
    %v307 = vld [vmem:[#allocation7 + $0x1d8] sm:$0xff]
    %v308 = vld [vmem:[#allocation7 + $0x1e0] sm:$0xff]
    %v309 = vld [vmem:[#allocation7 + $0x1e8] sm:$0xff]
    %v310 = vld [vmem:[#allocation7 + $0x1f0] sm:$0xff]
    %v311 = vld [vmem:[#allocation7 + $0x1f8] sm:$0xff]
    %v312 = vld [vmem:[%s4] sm:$0xf]
    %v314 = vlaneseq
    %v315 = vshrl.u32 %v314, 7
    %v316 = vsub.s32 0, %v315
    %v317 = vrot.slane %v312, %v316
    %v318 = vlaneseq
    %v319 = vshrl.u32 %v318, 7
    %v320 = vsub.s32 1, %v319
    %v321 = vrot.slane %v312, %v320
    %v322 = vlaneseq
    %v323 = vshrl.u32 %v322, 7
    %v324 = vsub.s32 2, %v323
    %v325 = vrot.slane %v312, %v324
    %v326 = vlaneseq
    %v327 = vshrl.u32 %v326, 7
    %v328 = vsub.s32 3, %v327
    %v329 = vrot.slane %v312, %v328
    %v398 = vunpack.c.l.b16 %v248
    %v399 = vunpack.c.h.b16 %v248
    %v400 = vunpack.c.l.b16 %v249
    %v401 = vunpack.c.h.b16 %v249
    %v402 = vunpack.c.l.b16 %v250
    %v403 = vunpack.c.h.b16 %v250
    %v404 = vunpack.c.l.b16 %v251
    %v405 = vunpack.c.h.b16 %v251
    %v406 = vunpack.c.l.b16 %v252
    %v407 = vunpack.c.h.b16 %v252
    %v408 = vunpack.c.l.b16 %v253
    %v409 = vunpack.c.h.b16 %v253
    %v410 = vunpack.c.l.b16 %v254
    %v411 = vunpack.c.h.b16 %v254
    %v412 = vunpack.c.l.b16 %v255
    %v413 = vunpack.c.h.b16 %v255
    %v414 = vunpack.c.l.b16 %v256
    %v415 = vunpack.c.h.b16 %v256
    %v416 = vunpack.c.l.b16 %v257
    %v417 = vunpack.c.h.b16 %v257
    %v418 = vunpack.c.l.b16 %v258
    %v419 = vunpack.c.h.b16 %v258
    %v420 = vunpack.c.l.b16 %v259
    %v421 = vunpack.c.h.b16 %v259
    %v422 = vunpack.c.l.b16 %v260
    %v423 = vunpack.c.h.b16 %v260
    %v424 = vunpack.c.l.b16 %v261
    %v425 = vunpack.c.h.b16 %v261
    %v426 = vunpack.c.l.b16 %v262
    %v427 = vunpack.c.h.b16 %v262
    %v428 = vunpack.c.l.b16 %v263
    %v429 = vunpack.c.h.b16 %v263
    %v430 = vunpack.c.l.b16 %v264
    %v431 = vunpack.c.h.b16 %v264
    %v432 = vunpack.c.l.b16 %v265
    %v433 = vunpack.c.h.b16 %v265
    %v434 = vunpack.c.l.b16 %v266
    %v435 = vunpack.c.h.b16 %v266
    %v436 = vunpack.c.l.b16 %v267
    %v437 = vunpack.c.h.b16 %v267
    %v438 = vunpack.c.l.b16 %v268
    %v439 = vunpack.c.h.b16 %v268
    %v440 = vunpack.c.l.b16 %v269
    %v441 = vunpack.c.h.b16 %v269
    %v442 = vunpack.c.l.b16 %v270
    %v443 = vunpack.c.h.b16 %v270
    %v444 = vunpack.c.l.b16 %v271
    %v445 = vunpack.c.h.b16 %v271
    %v446 = vunpack.c.l.b16 %v272
    %v447 = vunpack.c.h.b16 %v272
    %v448 = vunpack.c.l.b16 %v273
    %v449 = vunpack.c.h.b16 %v273
    %v450 = vunpack.c.l.b16 %v274
    %v451 = vunpack.c.h.b16 %v274
    %v452 = vunpack.c.l.b16 %v275
    %v453 = vunpack.c.h.b16 %v275
    %v454 = vunpack.c.l.b16 %v276
    %v455 = vunpack.c.h.b16 %v276
    %v456 = vunpack.c.l.b16 %v277
    %v457 = vunpack.c.h.b16 %v277
    %v458 = vunpack.c.l.b16 %v278
    %v459 = vunpack.c.h.b16 %v278
    %v460 = vunpack.c.l.b16 %v279
    %v461 = vunpack.c.h.b16 %v279
    %v462 = vunpack.c.l.b16 %v280
    %v463 = vunpack.c.h.b16 %v280
    %v464 = vunpack.c.l.b16 %v281
    %v465 = vunpack.c.h.b16 %v281
    %v466 = vunpack.c.l.b16 %v282
    %v467 = vunpack.c.h.b16 %v282
    %v468 = vunpack.c.l.b16 %v283
    %v469 = vunpack.c.h.b16 %v283
    %v470 = vunpack.c.l.b16 %v284
    %v471 = vunpack.c.h.b16 %v284
    %v472 = vunpack.c.l.b16 %v285
    %v473 = vunpack.c.h.b16 %v285
    %v474 = vunpack.c.l.b16 %v286
    %v475 = vunpack.c.h.b16 %v286
    %v476 = vunpack.c.l.b16 %v287
    %v477 = vunpack.c.h.b16 %v287
    %v478 = vunpack.c.l.b16 %v288
    %v479 = vunpack.c.h.b16 %v288
    %v480 = vunpack.c.l.b16 %v289
    %v481 = vunpack.c.h.b16 %v289
    %v482 = vunpack.c.l.b16 %v290
    %v483 = vunpack.c.h.b16 %v290
    %v484 = vunpack.c.l.b16 %v291
    %v485 = vunpack.c.h.b16 %v291
    %v486 = vunpack.c.l.b16 %v292
    %v487 = vunpack.c.h.b16 %v292
    %v488 = vunpack.c.l.b16 %v293
    %v489 = vunpack.c.h.b16 %v293
    %v490 = vunpack.c.l.b16 %v294
    %v491 = vunpack.c.h.b16 %v294
    %v492 = vunpack.c.l.b16 %v295
    %v493 = vunpack.c.h.b16 %v295
    %v494 = vunpack.c.l.b16 %v296
    %v495 = vunpack.c.h.b16 %v296
    %v496 = vunpack.c.l.b16 %v297
    %v497 = vunpack.c.h.b16 %v297
    %v498 = vunpack.c.l.b16 %v298
    %v499 = vunpack.c.h.b16 %v298
    %v500 = vunpack.c.l.b16 %v299
    %v501 = vunpack.c.h.b16 %v299
    %v502 = vunpack.c.l.b16 %v300
    %v503 = vunpack.c.h.b16 %v300
    %v504 = vunpack.c.l.b16 %v301
    %v505 = vunpack.c.h.b16 %v301
    %v506 = vunpack.c.l.b16 %v302
    %v507 = vunpack.c.h.b16 %v302
    %v508 = vunpack.c.l.b16 %v303
    %v509 = vunpack.c.h.b16 %v303
    %v510 = vunpack.c.l.b16 %v304
    %v511 = vunpack.c.h.b16 %v304
    %v512 = vunpack.c.l.b16 %v305
    %v513 = vunpack.c.h.b16 %v305
    %v514 = vunpack.c.l.b16 %v306
    %v515 = vunpack.c.h.b16 %v306
    %v516 = vunpack.c.l.b16 %v307
    %v517 = vunpack.c.h.b16 %v307
    %v518 = vunpack.c.l.b16 %v308
    %v519 = vunpack.c.h.b16 %v308
    %v520 = vunpack.c.l.b16 %v309
    %v521 = vunpack.c.h.b16 %v309
    %v522 = vunpack.c.l.b16 %v310
    %v523 = vunpack.c.h.b16 %v310
    %v524 = vunpack.c.l.b16 %v311
    %v525 = vunpack.c.h.b16 %v311
    %v526 = vpack.c.b16 %v402, %v398
    %v527 = vpack.c.b16 %v403, %v399
    %v528 = vpack.c.b16 %v404, %v400
    %v529 = vpack.c.b16 %v405, %v401
    %v530 = vpack.c.b16 %v410, %v406
    %v531 = vpack.c.b16 %v411, %v407
    %v532 = vpack.c.b16 %v412, %v408
    %v533 = vpack.c.b16 %v413, %v409
    %v534 = vpack.c.b16 %v418, %v414
    %v535 = vpack.c.b16 %v419, %v415
    %v536 = vpack.c.b16 %v420, %v416
    %v537 = vpack.c.b16 %v421, %v417
    %v538 = vpack.c.b16 %v426, %v422
    %v539 = vpack.c.b16 %v427, %v423
    %v540 = vpack.c.b16 %v428, %v424
    %v541 = vpack.c.b16 %v429, %v425
    %v542 = vpack.c.b16 %v434, %v430
    %v543 = vpack.c.b16 %v435, %v431
    %v544 = vpack.c.b16 %v436, %v432
    %v545 = vpack.c.b16 %v437, %v433
    %v546 = vpack.c.b16 %v442, %v438
    %v547 = vpack.c.b16 %v443, %v439
    %v548 = vpack.c.b16 %v444, %v440
    %v549 = vpack.c.b16 %v445, %v441
    %v550 = vpack.c.b16 %v450, %v446
    %v551 = vpack.c.b16 %v451, %v447
    %v552 = vpack.c.b16 %v452, %v448
    %v553 = vpack.c.b16 %v453, %v449
    %v554 = vpack.c.b16 %v458, %v454
    %v555 = vpack.c.b16 %v459, %v455
    %v556 = vpack.c.b16 %v460, %v456
    %v557 = vpack.c.b16 %v461, %v457
    %v558 = vpack.c.b16 %v466, %v462
    %v559 = vpack.c.b16 %v467, %v463
    %v560 = vpack.c.b16 %v468, %v464
    %v561 = vpack.c.b16 %v469, %v465
    %v562 = vpack.c.b16 %v474, %v470
    %v563 = vpack.c.b16 %v475, %v471
    %v564 = vpack.c.b16 %v476, %v472
    %v565 = vpack.c.b16 %v477, %v473
    %v566 = vpack.c.b16 %v482, %v478
    %v567 = vpack.c.b16 %v483, %v479
    %v568 = vpack.c.b16 %v484, %v480
    %v569 = vpack.c.b16 %v485, %v481
    %v570 = vpack.c.b16 %v490, %v486
    %v571 = vpack.c.b16 %v491, %v487
    %v572 = vpack.c.b16 %v492, %v488
    %v573 = vpack.c.b16 %v493, %v489
    %v574 = vpack.c.b16 %v498, %v494
    %v575 = vpack.c.b16 %v499, %v495
    %v576 = vpack.c.b16 %v500, %v496
    %v577 = vpack.c.b16 %v501, %v497
    %v578 = vpack.c.b16 %v506, %v502
    %v579 = vpack.c.b16 %v507, %v503
    %v580 = vpack.c.b16 %v508, %v504
    %v581 = vpack.c.b16 %v509, %v505
    %v582 = vpack.c.b16 %v514, %v510
    %v583 = vpack.c.b16 %v515, %v511
    %v584 = vpack.c.b16 %v516, %v512
    %v585 = vpack.c.b16 %v517, %v513
    %v586 = vpack.c.b16 %v522, %v518
    %v587 = vpack.c.b16 %v523, %v519
    %v588 = vpack.c.b16 %v524, %v520
    %v589 = vpack.c.b16 %v525, %v521
    %654 = vmatprep.subr.bf16.mxu0 %v527
    %655 = vmatpush1.bf16.msra.mxu0 %v526
    %656 = vmatprep.subr.bf16.mxu0 %v531
    %657 = vmatpush1.bf16.msra.mxu0 %v530
    %658 = vmatprep.subr.bf16.mxu0 %v535
    %659 = vmatpush1.bf16.msra.mxu0 %v534
    %660 = vmatprep.subr.bf16.mxu0 %v539
    %661 = vmatpush1.bf16.msra.mxu0 %v538
    %662 = vmatprep.subr.bf16.mxu0 %v543
    %663 = vmatpush1.bf16.msra.mxu0 %v542
    %664 = vmatprep.subr.bf16.mxu0 %v547
    %665 = vmatpush1.bf16.msra.mxu0 %v546
    %666 = vmatprep.subr.bf16.mxu0 %v551
    %667 = vmatpush1.bf16.msra.mxu0 %v550
    %668 = vmatprep.subr.bf16.mxu0 %v555
    %669 = vmatpush1.bf16.msra.mxu0 %v554
    %670 = vmatprep.subr.bf16.mxu0 %v559
    %671 = vmatpush1.bf16.msra.mxu0 %v558
    %672 = vmatprep.subr.bf16.mxu0 %v563
    %673 = vmatpush1.bf16.msra.mxu0 %v562
    %674 = vmatprep.subr.bf16.mxu0 %v567
    %675 = vmatpush1.bf16.msra.mxu0 %v566
    %676 = vmatprep.subr.bf16.mxu0 %v571
    %677 = vmatpush1.bf16.msra.mxu0 %v570
    %678 = vmatprep.subr.bf16.mxu0 %v575
    %679 = vmatpush1.bf16.msra.mxu0 %v574
    %680 = vmatprep.subr.bf16.mxu0 %v579
    %681 = vmatpush1.bf16.msra.mxu0 %v578
    %682 = vmatprep.subr.bf16.mxu0 %v583
    %683 = vmatpush1.bf16.msra.mxu0 %v582
    %684 = vmatprep.subr.bf16.mxu0 %v587
    %685 = vmatpush1.bf16.msra.mxu0 %v586
    %686 = vmatprep.mubr.bf16.mxu0 %v247
    %687 = vmatmul.mubr.bf16.gmra.mrb[0].mxu0 %v246
    %v688 = vpop.f32.mrb[0].mxu0
    %v689 = vadd.f32 %v317, %v688
    %v690 = vpop.f32.mrb[0].mxu0
    %v691 = vadd.f32 %v321, %v690
    %v692 = vpop.f32.mrb[0].mxu0
    %v693 = vadd.f32 %v317, %v692
    %v694 = vpop.f32.mrb[0].mxu0
    %v695 = vadd.f32 %v321, %v694
    %696 = vdwg.mxu0
    %697 = vmatprep.subr.bf16.mxu0 %v529
    %698 = vmatpush1.bf16.msra.mxu0 %v528
    %699 = vmatprep.subr.bf16.mxu0 %v533
    %700 = vmatpush1.bf16.msra.mxu0 %v532
    %701 = vmatprep.subr.bf16.mxu0 %v537
    %702 = vmatpush1.bf16.msra.mxu0 %v536
    %703 = vmatprep.subr.bf16.mxu0 %v541
    %704 = vmatpush1.bf16.msra.mxu0 %v540
    %705 = vmatprep.subr.bf16.mxu0 %v545
    %706 = vmatpush1.bf16.msra.mxu0 %v544
    %707 = vmatprep.subr.bf16.mxu0 %v549
    %708 = vmatpush1.bf16.msra.mxu0 %v548
    %709 = vmatprep.subr.bf16.mxu0 %v553
    %710 = vmatpush1.bf16.msra.mxu0 %v552
    %711 = vmatprep.subr.bf16.mxu0 %v557
    %712 = vmatpush1.bf16.msra.mxu0 %v556
    %713 = vmatprep.subr.bf16.mxu0 %v561
    %714 = vmatpush1.bf16.msra.mxu0 %v560
    %715 = vmatprep.subr.bf16.mxu0 %v565
    %716 = vmatpush1.bf16.msra.mxu0 %v564
    %717 = vmatprep.subr.bf16.mxu0 %v569
    %718 = vmatpush1.bf16.msra.mxu0 %v568
    %719 = vmatprep.subr.bf16.mxu0 %v573
    %720 = vmatpush1.bf16.msra.mxu0 %v572
    %721 = vmatprep.subr.bf16.mxu0 %v577
    %722 = vmatpush1.bf16.msra.mxu0 %v576
    %723 = vmatprep.subr.bf16.mxu0 %v581
    %724 = vmatpush1.bf16.msra.mxu0 %v580
    %725 = vmatprep.subr.bf16.mxu0 %v585
    %726 = vmatpush1.bf16.msra.mxu0 %v584
    %727 = vmatprep.subr.bf16.mxu0 %v589
    %728 = vmatpush1.bf16.msra.mxu0 %v588
    %729 = vmatprep.mubr.bf16.mxu0 %v247
    %730 = vmatmul.mubr.bf16.gmra.mrb[0].mxu0 %v246
    %v731 = vpop.f32.mrb[0].mxu0
    %v732 = vadd.f32 %v325, %v731
    %v733 = vpop.f32.mrb[0].mxu0
    %v734 = vadd.f32 %v329, %v733
    %v735 = vpop.f32.mrb[0].mxu0
    %v736 = vadd.f32 %v325, %v735
    %v737 = vpop.f32.mrb[0].mxu0
    %v738 = vadd.f32 %v329, %v737
    %739 = vdwg.mxu0
    %v740 = vmax.f32 %v689, 0.0
    %v741 = vmax.f32 %v691, 0.0
    %v742 = vmax.f32 %v732, 0.0
    %v743 = vmax.f32 %v734, 0.0
    %v744 = vmax.f32 %v693, 0.0
    %v745 = vmax.f32 %v695, 0.0
    %v746 = vmax.f32 %v736, 0.0
    %v747 = vmax.f32 %v738, 0.0
    %v748 = vpack.c.bf16 %v744, %v740
    %v749 = vpack.c.bf16 %v745, %v741
    %v750 = vpack.c.bf16 %v746, %v742
    %v751 = vpack.c.bf16 %v747, %v743
    %v752 = vld [vmem:[#allocation8] sm:$0xf]
    %v753 = vld [vmem:[#allocation8 + $0x4] sm:$0xf]
    %v754 = vld [vmem:[#allocation8 + $0x8] sm:$0xf]
    %v755 = vld [vmem:[#allocation8 + $0xc] sm:$0xf]
    %v756 = vld [vmem:[#allocation8 + $0x10] sm:$0xf]
    %v757 = vld [vmem:[#allocation8 + $0x14] sm:$0xf]
    %v758 = vld [vmem:[#allocation8 + $0x18] sm:$0xf]
    %v759 = vld [vmem:[#allocation8 + $0x1c] sm:$0xf]
    %v760 = vld [vmem:[#allocation8 + $0x20] sm:$0xf]
    %v761 = vld [vmem:[#allocation8 + $0x24] sm:$0xf]
    %v762 = vld [vmem:[#allocation8 + $0x28] sm:$0xf]
    %v763 = vld [vmem:[#allocation8 + $0x2c] sm:$0xf]
    %v764 = vld [vmem:[#allocation8 + $0x30] sm:$0xf]
    %v765 = vld [vmem:[#allocation8 + $0x34] sm:$0xf]
    %v766 = vld [vmem:[#allocation8 + $0x38] sm:$0xf]
    %v767 = vld [vmem:[#allocation8 + $0x3c] sm:$0xf]
    %v768 = vld [vmem:[#allocation8 + $0x40] sm:$0xf]
    %v769 = vld [vmem:[#allocation8 + $0x44] sm:$0xf]
    %v770 = vld [vmem:[#allocation8 + $0x48] sm:$0xf]
    %v771 = vld [vmem:[#allocation8 + $0x4c] sm:$0xf]
    %v772 = vld [vmem:[#allocation8 + $0x50] sm:$0xf]
    %v773 = vld [vmem:[#allocation8 + $0x54] sm:$0xf]
    %v774 = vld [vmem:[#allocation8 + $0x58] sm:$0xf]
    %v775 = vld [vmem:[#allocation8 + $0x5c] sm:$0xf]
    %v776 = vld [vmem:[#allocation8 + $0x60] sm:$0xf]
    %v777 = vld [vmem:[#allocation8 + $0x64] sm:$0xf]
    %v778 = vld [vmem:[#allocation8 + $0x68] sm:$0xf]
    %v779 = vld [vmem:[#allocation8 + $0x6c] sm:$0xf]
    %v780 = vld [vmem:[#allocation8 + $0x70] sm:$0xf]
    %v781 = vld [vmem:[#allocation8 + $0x74] sm:$0xf]
    %v782 = vld [vmem:[#allocation8 + $0x78] sm:$0xf]
    %v783 = vld [vmem:[#allocation8 + $0x7c] sm:$0xf]
    %v784 = vld [vmem:[#allocation8 + $0x80] sm:$0xf]
    %v785 = vld [vmem:[#allocation8 + $0x84] sm:$0xf]
    %v786 = vld [vmem:[#allocation8 + $0x88] sm:$0xf]
    %v787 = vld [vmem:[#allocation8 + $0x8c] sm:$0xf]
    %v788 = vld [vmem:[#allocation8 + $0x90] sm:$0xf]
    %v789 = vld [vmem:[#allocation8 + $0x94] sm:$0xf]
    %v790 = vld [vmem:[#allocation8 + $0x98] sm:$0xf]
    %v791 = vld [vmem:[#allocation8 + $0x9c] sm:$0xf]
    %v792 = vld [vmem:[#allocation8 + $0xa0] sm:$0xf]
    %v793 = vld [vmem:[#allocation8 + $0xa4] sm:$0xf]
    %v794 = vld [vmem:[#allocation8 + $0xa8] sm:$0xf]
    %v795 = vld [vmem:[#allocation8 + $0xac] sm:$0xf]
    %v796 = vld [vmem:[#allocation8 + $0xb0] sm:$0xf]
    %v797 = vld [vmem:[#allocation8 + $0xb4] sm:$0xf]
    %v798 = vld [vmem:[#allocation8 + $0xb8] sm:$0xf]
    %v799 = vld [vmem:[#allocation8 + $0xbc] sm:$0xf]
    %v800 = vld [vmem:[#allocation8 + $0xc0] sm:$0xf]
    %v801 = vld [vmem:[#allocation8 + $0xc4] sm:$0xf]
    %v802 = vld [vmem:[#allocation8 + $0xc8] sm:$0xf]
    %v803 = vld [vmem:[#allocation8 + $0xcc] sm:$0xf]
    %v804 = vld [vmem:[#allocation8 + $0xd0] sm:$0xf]
    %v805 = vld [vmem:[#allocation8 + $0xd4] sm:$0xf]
    %v806 = vld [vmem:[#allocation8 + $0xd8] sm:$0xf]
    %v807 = vld [vmem:[#allocation8 + $0xdc] sm:$0xf]
    %v808 = vld [vmem:[#allocation8 + $0xe0] sm:$0xf]
    %v809 = vld [vmem:[#allocation8 + $0xe4] sm:$0xf]
    %v810 = vld [vmem:[#allocation8 + $0xe8] sm:$0xf]
    %v811 = vld [vmem:[#allocation8 + $0xec] sm:$0xf]
    %v812 = vld [vmem:[#allocation8 + $0xf0] sm:$0xf]
    %v813 = vld [vmem:[#allocation8 + $0xf4] sm:$0xf]
    %v814 = vld [vmem:[#allocation8 + $0xf8] sm:$0xf]
    %v815 = vld [vmem:[#allocation8 + $0xfc] sm:$0xf]
    %v816 = vld [vmem:[%s6] sm:$0x1]
    %v818 = vlaneseq
    %v819 = vshrl.u32 %v818, 7
    %v820 = vsub.s32 0, %v819
    %v821 = vrot.slane %v816, %v820
    %v887 = vunpack.c.l.b16 %v752
    %v888 = vunpack.c.l.b16 %v753
    %v889 = vunpack.c.l.b16 %v754
    %v890 = vunpack.c.l.b16 %v755
    %v891 = vunpack.c.l.b16 %v756
    %v892 = vunpack.c.l.b16 %v757
    %v893 = vunpack.c.l.b16 %v758
    %v894 = vunpack.c.l.b16 %v759
    %v895 = vunpack.c.l.b16 %v760
    %v896 = vunpack.c.l.b16 %v761
    %v897 = vunpack.c.l.b16 %v762
    %v898 = vunpack.c.l.b16 %v763
    %v899 = vunpack.c.l.b16 %v764
    %v900 = vunpack.c.l.b16 %v765
    %v901 = vunpack.c.l.b16 %v766
    %v902 = vunpack.c.l.b16 %v767
    %v903 = vunpack.c.l.b16 %v768
    %v904 = vunpack.c.l.b16 %v769
    %v905 = vunpack.c.l.b16 %v770
    %v906 = vunpack.c.l.b16 %v771
    %v907 = vunpack.c.l.b16 %v772
    %v908 = vunpack.c.l.b16 %v773
    %v909 = vunpack.c.l.b16 %v774
    %v910 = vunpack.c.l.b16 %v775
    %v911 = vunpack.c.l.b16 %v776
    %v912 = vunpack.c.l.b16 %v777
    %v913 = vunpack.c.l.b16 %v778
    %v914 = vunpack.c.l.b16 %v779
    %v915 = vunpack.c.l.b16 %v780
    %v916 = vunpack.c.l.b16 %v781
    %v917 = vunpack.c.l.b16 %v782
    %v918 = vunpack.c.l.b16 %v783
    %v919 = vunpack.c.l.b16 %v784
    %v920 = vunpack.c.l.b16 %v785
    %v921 = vunpack.c.l.b16 %v786
    %v922 = vunpack.c.l.b16 %v787
    %v923 = vunpack.c.l.b16 %v788
    %v924 = vunpack.c.l.b16 %v789
    %v925 = vunpack.c.l.b16 %v790
    %v926 = vunpack.c.l.b16 %v791
    %v927 = vunpack.c.l.b16 %v792
    %v928 = vunpack.c.l.b16 %v793
    %v929 = vunpack.c.l.b16 %v794
    %v930 = vunpack.c.l.b16 %v795
    %v931 = vunpack.c.l.b16 %v796
    %v932 = vunpack.c.l.b16 %v797
    %v933 = vunpack.c.l.b16 %v798
    %v934 = vunpack.c.l.b16 %v799
    %v935 = vunpack.c.l.b16 %v800
    %v936 = vunpack.c.l.b16 %v801
    %v937 = vunpack.c.l.b16 %v802
    %v938 = vunpack.c.l.b16 %v803
    %v939 = vunpack.c.l.b16 %v804
    %v940 = vunpack.c.l.b16 %v805
    %v941 = vunpack.c.l.b16 %v806
    %v942 = vunpack.c.l.b16 %v807
    %v943 = vunpack.c.l.b16 %v808
    %v944 = vunpack.c.l.b16 %v809
    %v945 = vunpack.c.l.b16 %v810
    %v946 = vunpack.c.l.b16 %v811
    %v947 = vunpack.c.l.b16 %v812
    %v948 = vunpack.c.l.b16 %v813
    %v949 = vunpack.c.l.b16 %v814
    %v950 = vunpack.c.l.b16 %v815
    %v951 = vpack.c.b16 %v888, %v887
    %v952 = vpack.c.b16 %v890, %v889
    %v953 = vpack.c.b16 %v892, %v891
    %v954 = vpack.c.b16 %v894, %v893
    %v955 = vpack.c.b16 %v896, %v895
    %v956 = vpack.c.b16 %v898, %v897
    %v957 = vpack.c.b16 %v900, %v899
    %v958 = vpack.c.b16 %v902, %v901
    %v959 = vpack.c.b16 %v904, %v903
    %v960 = vpack.c.b16 %v906, %v905
    %v961 = vpack.c.b16 %v908, %v907
    %v962 = vpack.c.b16 %v910, %v909
    %v963 = vpack.c.b16 %v912, %v911
    %v964 = vpack.c.b16 %v914, %v913
    %v965 = vpack.c.b16 %v916, %v915
    %v966 = vpack.c.b16 %v918, %v917
    %v967 = vpack.c.b16 %v920, %v919
    %v968 = vpack.c.b16 %v922, %v921
    %v969 = vpack.c.b16 %v924, %v923
    %v970 = vpack.c.b16 %v926, %v925
    %v971 = vpack.c.b16 %v928, %v927
    %v972 = vpack.c.b16 %v930, %v929
    %v973 = vpack.c.b16 %v932, %v931
    %v974 = vpack.c.b16 %v934, %v933
    %v975 = vpack.c.b16 %v936, %v935
    %v976 = vpack.c.b16 %v938, %v937
    %v977 = vpack.c.b16 %v940, %v939
    %v978 = vpack.c.b16 %v942, %v941
    %v979 = vpack.c.b16 %v944, %v943
    %v980 = vpack.c.b16 %v946, %v945
    %v981 = vpack.c.b16 %v948, %v947
    %v982 = vpack.c.b16 %v950, %v949
    %1015 = vmatprep.subr.bf16.mxu0 0
    %1016 = vmatpush1.bf16.msra.mxu0 %v951
    %1017 = vmatprep.subr.bf16.mxu0 0
    %1018 = vmatpush1.bf16.msra.mxu0 %v952
    %1019 = vmatprep.subr.bf16.mxu0 0
    %1020 = vmatpush1.bf16.msra.mxu0 %v953
    %1021 = vmatprep.subr.bf16.mxu0 0
    %1022 = vmatpush1.bf16.msra.mxu0 %v954
    %1023 = vmatprep.subr.bf16.mxu0 0
    %1024 = vmatpush1.bf16.msra.mxu0 %v955
    %1025 = vmatprep.subr.bf16.mxu0 0
    %1026 = vmatpush1.bf16.msra.mxu0 %v956
    %1027 = vmatprep.subr.bf16.mxu0 0
    %1028 = vmatpush1.bf16.msra.mxu0 %v957
    %1029 = vmatprep.subr.bf16.mxu0 0
    %1030 = vmatpush1.bf16.msra.mxu0 %v958
    %1031 = vmatprep.subr.bf16.mxu0 0
    %1032 = vmatpush1.bf16.msra.mxu0 %v959
    %1033 = vmatprep.subr.bf16.mxu0 0
    %1034 = vmatpush1.bf16.msra.mxu0 %v960
    %1035 = vmatprep.subr.bf16.mxu0 0
    %1036 = vmatpush1.bf16.msra.mxu0 %v961
    %1037 = vmatprep.subr.bf16.mxu0 0
    %1038 = vmatpush1.bf16.msra.mxu0 %v962
    %1039 = vmatprep.subr.bf16.mxu0 0
    %1040 = vmatpush1.bf16.msra.mxu0 %v963
    %1041 = vmatprep.subr.bf16.mxu0 0
    %1042 = vmatpush1.bf16.msra.mxu0 %v964
    %1043 = vmatprep.subr.bf16.mxu0 0
    %1044 = vmatpush1.bf16.msra.mxu0 %v965
    %1045 = vmatprep.subr.bf16.mxu0 0
    %1046 = vmatpush1.bf16.msra.mxu0 %v966
    %1047 = vmatprep.mubr.bf16.mxu0 %v749
    %1048 = vmatmul.mubr.bf16.gmra.mrb[0].mxu0 %v748
    %v1049 = vpop.f32.mrb[0].mxu0
    %v1050 = vadd.f32 %v821, %v1049
    %v1051 = vpop.f32.mrb[0].mxu0
    %v1052 = vpop.f32.mrb[0].mxu0
    %v1053 = vadd.f32 %v821, %v1052
    %v1054 = vpop.f32.mrb[0].mxu0
    %1055 = vdwg.mxu0
    %1056 = vmatprep.subr.bf16.mxu0 0
    %1057 = vmatpush1.bf16.msra.mxu0 %v967
    %1058 = vmatprep.subr.bf16.mxu0 0
    %1059 = vmatpush1.bf16.msra.mxu0 %v968
    %1060 = vmatprep.subr.bf16.mxu0 0
    %1061 = vmatpush1.bf16.msra.mxu0 %v969
    %1062 = vmatprep.subr.bf16.mxu0 0
    %1063 = vmatpush1.bf16.msra.mxu0 %v970
    %1064 = vmatprep.subr.bf16.mxu0 0
    %1065 = vmatpush1.bf16.msra.mxu0 %v971
    %1066 = vmatprep.subr.bf16.mxu0 0
    %1067 = vmatpush1.bf16.msra.mxu0 %v972
    %1068 = vmatprep.subr.bf16.mxu0 0
    %1069 = vmatpush1.bf16.msra.mxu0 %v973
    %1070 = vmatprep.subr.bf16.mxu0 0
    %1071 = vmatpush1.bf16.msra.mxu0 %v974
    %1072 = vmatprep.subr.bf16.mxu0 0
    %1073 = vmatpush1.bf16.msra.mxu0 %v975
    %1074 = vmatprep.subr.bf16.mxu0 0
    %1075 = vmatpush1.bf16.msra.mxu0 %v976
    %1076 = vmatprep.subr.bf16.mxu0 0
    %1077 = vmatpush1.bf16.msra.mxu0 %v977
    %1078 = vmatprep.subr.bf16.mxu0 0
    %1079 = vmatpush1.bf16.msra.mxu0 %v978
    %1080 = vmatprep.subr.bf16.mxu0 0
    %1081 = vmatpush1.bf16.msra.mxu0 %v979
    %1082 = vmatprep.subr.bf16.mxu0 0
    %1083 = vmatpush1.bf16.msra.mxu0 %v980
    %1084 = vmatprep.subr.bf16.mxu0 0
    %1085 = vmatpush1.bf16.msra.mxu0 %v981
    %1086 = vmatprep.subr.bf16.mxu0 0
    %1087 = vmatpush1.bf16.msra.mxu0 %v982
    %1088 = vmatprep.mubr.bf16.mxu0 %v751
    %1089 = vmatmul.mubr.bf16.gmra.mrb[0].mxu0 %v750
    %v1090 = vpop.f32.mrb[0].mxu0
    %v1091 = vadd.f32 %v1050, %v1090
    %v1092 = vpop.f32.mrb[0].mxu0
    %v1093 = vpop.f32.mrb[0].mxu0
    %v1094 = vadd.f32 %v1053, %v1093
    %v1095 = vpop.f32.mrb[0].mxu0
    %1096 = vdwg.mxu0
    %v1097 = vxor.u32 %v1091, 2147483648
    %v1098 = vxor.u32 %v1094, 2147483648
    %v1099 = vmul.f32 %v1097, 1.442695
    %v1100 = vpow.pop %v1099
    %v1101 = vmul.f32 %v1098, 1.442695
    %v1102 = vpow.pop %v1101
    %v1103 = vadd.f32 %v1100, 1.0
    %v1104 = vadd.f32 %v1102, 1.0
    %v1105 = vrcp.pop %v1103
    %v1106 = vmul.f32 1.0, %v1105
    %v1107 = vrcp.pop %v1104
    %v1108 = vmul.f32 1.0, %v1107
    %1109 = vst [vmem:[#allocation10] sm:$0xff] %v1106
    %1110 = vst [vmem:[#allocation10 + $0x8] sm:$0xff] %v1108
    // Predicated region
    $region46: #{tpu_custom_call.1} parent=1 // pred_check
      _
    $region47: #{tpu_custom_call.1} parent=1 // pred_check_branch
      %1112 = sbr.rel (0) target = $region49
    $region48: #{tpu_custom_call.1} parent=1 // pred_region
      %s1114 = ssub.s32 256, 256
      %1115 = vsyncadd [#allocation4], %s1114
      %s1116 = sshll.u32 [#allocation10], 4
      %s1117 = int_to_ptr.vmem [resolvable:$true] %s1116
      %1122 = dma.vmem_to_hbm [thread:$0]  %s1117, 256, %s7, [#allocation4], 128, 128, 8
    $region49: #{tpu_custom_call.1} parent=1 // pred_fallthru
      _
    // Predicated region
    $region50: #{tpu_custom_call.1} parent=1 // pred_check
      _
    $region51: #{tpu_custom_call.1} parent=1 // pred_check_branch
      %1124 = sbr.rel (0) target = $region53
    $region52: #{tpu_custom_call.1} parent=1 // pred_region
      %1125 = dma.done [#allocation4], 256
    $region53: #{tpu_custom_call.1} parent=1 // pred_fallthru
      _
    %1126 = vsyncpa [#allocation3], 1
    %1127 = vsyncpa [#allocation6], 1
    %1128 = vsyncpa [#allocation9], 1
    %1129 = vsyncpa [#allocation4], 1

</llo_original>
